<compile_context>
chip_gen: v7x
topology: tpu7x:2x2x1
jax: 0.10.0
libtpu: 0.0.40
codegen_flags: <defaults>
</compile_context>

<pallas_src>
import jax
import jax.numpy as jnp
from jax.experimental import pallas as pl
from jax.experimental.pallas import tpu as pltpu

_LANE = 128          # lane width: last-dim alignment target
_SUBLANE = 8         # sublane: second-to-last-dim alignment target (f32)
_B_TILE_MAX = 128    # row tile (v5e-safe; fine on v6e/v7x)
_N_TILE_MAX = 512    # class tile (bounds weight VMEM residency)


def _round_up(n, m):
    return ((n + m - 1) // m) * m


def _linear_kernel(x_ref, wt_ref, b_ref, o_ref):
    # One MXU pass with f32 accumulation + one broadcasted VPU bias add.
    lhs = x_ref[...]
    if lhs.dtype != wt_ref.dtype:
        # bf16 weights: feed the MXU matching bf16 operands (accum stays f32).
        lhs = lhs.astype(wt_ref.dtype)
    acc = jnp.dot(lhs, wt_ref[...], preferred_element_type=jnp.float32)
    o_ref[...] = (acc + b_ref[...].astype(jnp.float32)).astype(o_ref.dtype)


def prepare_decoder_params(weight, bias, param_dtype=None):
    """One-time (init-time) parameter plumbing, outside the hot path.

    weight: (num_classes, embed_dim)  -- PyTorch nn.Linear layout
    bias:   (num_classes,)
    param_dtype: optional storage dtype for the weight (e.g. jnp.bfloat16 on
                 v6e/v7x to use the native-bf16 MXU and halve weight HBM bytes).

    Returns (wt_padded, bias_padded, num_classes) where
      wt_padded:   (E_pad, C_pad)  pre-transposed, zero-padded on BOTH the
                   contraction dim (E -> lane multiple) and the class dim.
      bias_padded: (1, C_pad)      float32, zero-padded.
    Zero padding is exact: padded K rows contribute 0 to the dot product and
    padded class columns are sliced off by the wrapper.
    """
    C, E = weight.shape
    c_pad = _round_up(C, _LANE)
    e_pad = _round_up(E, _LANE)
    wt_padded = jnp.zeros((e_pad, c_pad), weight.dtype).at[:E, :C].set(weight.T)
    if param_dtype is not None:
        wt_padded = wt_padded.astype(param_dtype)
    bias_padded = (
        jnp.zeros((1, c_pad), jnp.float32).at[0, :C].set(bias.astype(jnp.float32))
    )
    return wt_padded, bias_padded, C


def linear_decoder_forward(x, wt_padded, bias_padded, num_classes):
    """Pallas equivalent of nn.Linear(embed_dim, num_classes)(x).

    x:           (..., embed_dim)
    wt_padded:   (E_pad, C_pad)  from prepare_decoder_params
    bias_padded: (1, C_pad)      from prepare_decoder_params
    returns      (..., num_classes)
    """
    e_pad, c_pad = wt_padded.shape
    *lead, E = x.shape
    x2 = x.reshape(-1, E)
    B = x2.shape[0]

    # Lane-align the contraction dim (ideally the producer already emits
    # x with a lane-aligned last dim and this pad is a no-op).
    if E != e_pad:
        x2 = jnp.pad(x2, ((0, 0), (0, e_pad - E)))

    # Row tiling: round small batches up to a sublane multiple, cap at
    # _B_TILE_MAX, and pad rows so the grid divides evenly (any B works).
    b_tile = min(_B_TILE_MAX, _round_up(B, _SUBLANE))
    b_pad = _round_up(B, b_tile)
    if b_pad != B:
        x2 = jnp.pad(x2, ((0, b_pad - B), (0, 0)))

    # Class tiling: largest multiple of 128 (<= _N_TILE_MAX) dividing c_pad.
    n_tile = min(_N_TILE_MAX, c_pad)
    while c_pad % n_tile:
        n_tile -= _LANE

    grid = (b_pad // b_tile, c_pad // n_tile)

    # Scoped-VMEM budget from the actual double-buffered tile footprint,
    # capped at 48 MiB so it stays within v7x's 64 MiB physical VMEM.
    tile_bytes = (
        b_tile * e_pad * x2.dtype.itemsize          # x tile
        + e_pad * n_tile * wt_padded.dtype.itemsize  # weight tile
        + b_tile * n_tile * x.dtype.itemsize         # out tile
        + n_tile * bias_padded.dtype.itemsize        # bias tile
    )
    vmem_limit = int(min(max(2 * tile_bytes + (4 << 20), 32 << 20), 48 << 20))

    # TODO(synk): if weight-tile DMA ever exceeds per-tile matmul time
    # (tiny b_tile with huge E_pad*n_tile), deepen the weight pipeline with
    # pipeline_mode=pl.Buffered(3) -- re-check the VMEM budget first.
    out_padded = pl.pallas_call(
        _linear_kernel,
        out_shape=jax.ShapeDtypeStruct((b_pad, c_pad), x.dtype),
        grid=grid,
        in_specs=[
            pl.BlockSpec((b_tile, e_pad), lambda i, j: (i, 0)),
            pl.BlockSpec((e_pad, n_tile), lambda i, j: (0, j)),
            pl.BlockSpec((1, n_tile), lambda i, j: (0, j)),
        ],
        out_specs=pl.BlockSpec((b_tile, n_tile), lambda i, j: (i, j)),
        compiler_params=pltpu.CompilerParams(
            dimension_semantics=("parallel", "parallel"),
            vmem_limit_bytes=vmem_limit,
        ),
    )(x2, wt_padded, bias_padded)

    # Skip the slice entirely when nothing was padded (lane-dense slab is the
    # logical result); otherwise one slice restores the logical shape.
    if b_pad == B and c_pad == num_classes:
        out = out_padded
    else:
        out = out_padded[:B, :num_classes]
    # TODO(synk): if this decoder runs per-step inside a larger Pallas model,
    # fuse this matmul+bias as an epilogue of the preceding kernel instead of
    # a standalone pallas_call (dispatch cost dominates at tiny shapes).
    return out.reshape(*lead, num_classes)


if __name__ == "__main__":
    # Module config (matches __init__ defaults / small synthetic sizes).
    embed_dim = 100
    num_classes = 10

    key = jax.random.PRNGKey(0)
    kx, kw, kb, kx2 = jax.random.split(key, 4)

    # Deterministic synthetic parameters (no checkpoint load).
    weight = jax.random.normal(kw, (num_classes, embed_dim), jnp.float32) * 0.05
    bias = jax.random.normal(kb, (num_classes,), jnp.float32) * 0.01

    # ---- small batch, f32 params ----
    x = jax.random.normal(kx, (8, embed_dim), dtype=jnp.float32)
    wt_p, b_p, C = prepare_decoder_params(weight, bias)
    out = jax.block_until_ready(linear_decoder_forward(x, wt_p, b_p, C))
    ref = x @ weight.T + bias
    assert out.shape == (8, num_classes)
    assert jnp.allclose(out, ref, atol=1e-4, rtol=1e-4), "f32 mismatch vs reference"

    # ---- larger, non-tile-multiple batch, bf16 weights (MXU-native path) ----
    x2 = jax.random.normal(kx2, (300, embed_dim), dtype=jnp.float32)
    wt_bf, b_bf, C = prepare_decoder_params(weight, bias, param_dtype=jnp.bfloat16)
    out2 = jax.block_until_ready(linear_decoder_forward(x2, wt_bf, b_bf, C))
    ref2 = x2 @ weight.T + bias
    assert out2.shape == (300, num_classes)
    assert jnp.allclose(out2, ref2, atol=5e-2, rtol=5e-2), "bf16 mismatch vs reference"

    print("KERNEL_OK")
</pallas_src>

<mosaic_0001>
module attributes {stable_mosaic.version = 11 : i64} {
  func.func @_linear_kernel(%arg0: i32, %arg1: i32, %arg2: memref<8x128xf32, #tpu.memory_space<vmem>>, %arg3: memref<128x128xf32, #tpu.memory_space<vmem>>, %arg4: memref<1x128xf32, #tpu.memory_space<vmem>>, %arg5: memref<8x128xf32, #tpu.memory_space<vmem>>) attributes {dimension_semantics = [#tpu.dimension_semantics<parallel>, #tpu.dimension_semantics<parallel>], iteration_bounds = array<i64: 1, 1>, scalar_prefetch = 0 : i64, scratch_operands = 0 : i64, tpu.core_type = #tpu.core_type<tc>, window_params = [{transform_indices = @transform_0, window_bounds = array<i64: 8, 128>}, {transform_indices = @transform_1, window_bounds = array<i64: 128, 128>}, {transform_indices = @transform_2, window_bounds = array<i64: 1, 128>}, {transform_indices = @transform_3, window_bounds = array<i64: 8, 128>}]} {
    %c0 = arith.constant 0 : index
    %c0_0 = arith.constant 0 : index
    %0 = vector.load %arg2[%c0, %c0_0] : memref<8x128xf32, #tpu.memory_space<vmem>>, vector<8x128xf32>
    %c0_1 = arith.constant 0 : index
    %c0_2 = arith.constant 0 : index
    %1 = vector.load %arg3[%c0_1, %c0_2] : memref<128x128xf32, #tpu.memory_space<vmem>>, vector<128x128xf32>
    %cst = arith.constant dense<0.000000e+00> : vector<8x128xf32>
    %2 = tpu.matmul %0, %1, %cst {dimension_numbers = #tpu.dot_dimension_numbers<[1], [0], [0], [1], [0, 0, 1, 1], [], []>} : vector<8x128xf32>, vector<128x128xf32>, vector<8x128xf32> -> vector<8x128xf32>
    %c0_3 = arith.constant 0 : index
    %c0_4 = arith.constant 0 : index
    %3 = vector.load %arg4[%c0_3, %c0_4] : memref<1x128xf32, #tpu.memory_space<vmem>>, vector<1x128xf32>
    %4 = vector.broadcast %3 : vector<1x128xf32> to vector<8x128xf32>
    %5 = arith.addf %2, %4 : vector<8x128xf32>
    %c0_5 = arith.constant 0 : index
    %c0_6 = arith.constant 0 : index
    %6 = vector.load %arg5[%c0_5, %c0_6] : memref<8x128xf32, #tpu.memory_space<vmem>>, vector<8x128xf32>
    tpu.vector_store %arg5[%c0_5, %c0_6], %5 {strides = array<i32>} : memref<8x128xf32, #tpu.memory_space<vmem>>, vector<8x128xf32>,
    return
  }
  func.func @transform_0(%arg0: i32, %arg1: i32) -> (i32, i32) {
    %c0_i32 = arith.constant 0 : i32
    %c0_i32_0 = arith.constant 0 : i32
    return %arg0, %c0_i32 : i32, i32
  }
  func.func @transform_1(%arg0: i32, %arg1: i32) -> (i32, i32) {
    %c0_i32 = arith.constant 0 : i32
    %c0_i32_0 = arith.constant 0 : i32
    return %c0_i32, %arg1 : i32, i32
  }
  func.func @transform_2(%arg0: i32, %arg1: i32) -> (i32, i32) {
    %c0_i32 = arith.constant 0 : i32
    %c0_i32_0 = arith.constant 0 : i32
    return %c0_i32, %arg1 : i32, i32
  }
  func.func @transform_3(%arg0: i32, %arg1: i32) -> (i32, i32) {
    %c0_i32 = arith.constant 0 : i32
    return %arg0, %arg1 : i32, i32
  }
}

</mosaic_0001>

<llo_original>
// kernel: tpu_custom_call.1
$region0: #{tpu_custom_call.1}
  #allocation0 [shape = 'u32[]', space=smem, size = 0x4, offset = 0x4, fixed_abs, tag = 'smem constant byte address 0x4 - core index']
  #allocation1 [shape = 'u32[144,128]{1,0:T(1,128)}', space=vmem, size = 0x12000, scoped, tag = 'internal scratch']
  %s0 = inlined_call_operand.hbm [shape: f32[8,128], index: 0, kind: input, shape index: {}]
  %s1 = inlined_call_operand.hbm [shape: f32[128,128], index: 1, kind: input, shape index: {}]
  %s2 = inlined_call_operand.vmem [shape: f32[1,128], index: 2, kind: input, shape index: {}]
  %s3 = inlined_call_operand.hbm [shape: f32[8,128], index: 3, kind: output, shape index: {}]
  %s4 = sld [smem:[#allocation0]]
  $region30: #{tpu_custom_call.1} parent=0
    _
  %s6 = ssub.s32 1, %s4
  %s7 = scalar_select 0, %s6, %s4
  $region1: #{tpu_custom_call.1} parent=0
    #allocation2 [shape = 'u8[4096]{0}', space=vmem, size = 0x1000, scoped, tag = 'input window, operand 0, single buffered']
    #allocation3 [shape = 's32[1]{0}', space=sflag, size = 0x4, scoped, tag = 'scoped memory for tpu_custom_call.1']
    #allocation4 [shape = 's32[1]{0}', space=sflag, size = 0x4, scoped, tag = 'scoped memory for tpu_custom_call.1']
    #allocation5 [shape = 'u8[65536]{0}', space=vmem, size = 0x10000, scoped, tag = 'input window, operand 1, single buffered']
    #allocation6 [shape = 's32[1]{0}', space=sflag, size = 0x4, scoped, tag = 'scoped memory for tpu_custom_call.1']
    #allocation7 [shape = 'u8[4096]{0}', space=vmem, size = 0x1000, scoped, tag = 'output window, operand 0, single buffered']
    %8 = vsyncpa [#allocation3], 0
    %9 = vsyncpa [#allocation6], 0
    %10 = vsyncpa [#allocation4], 0
    // Predicated region
    $region2: #{tpu_custom_call.1} parent=1 // pred_check
      _
    $region3: #{tpu_custom_call.1} parent=1 // pred_check_branch
      %12 = sbr.rel (0) target = $region5
    $region4: #{tpu_custom_call.1} parent=1 // pred_region
      %s14 = ssub.s32 128, 128
      %15 = vsyncadd [#allocation3], %s14
      %s17 = sshll.u32 [#allocation2], 4
      %s18 = int_to_ptr.vmem [resolvable:$true] %s17
      %20 = dma.hbm_to_vmem [thread:$0]  %s0, 128, %s18, [#allocation3]
    $region5: #{tpu_custom_call.1} parent=1 // pred_fallthru
      _
    // Predicated region
    $region6: #{tpu_custom_call.1} parent=1 // pred_check
      _
    $region7: #{tpu_custom_call.1} parent=1 // pred_check_branch
      %22 = sbr.rel (0) target = $region9
    $region8: #{tpu_custom_call.1} parent=1 // pred_region
      %s24 = ssub.s32 2048, 2048
      %25 = vsyncadd [#allocation6], %s24
      %s26 = sshll.u32 [#allocation5], 4
      %s27 = int_to_ptr.vmem [resolvable:$true] %s26
      %32 = dma.hbm_to_vmem [thread:$0]  %s1, 2048, %s27, [#allocation6], 128, 128, 8
    $region9: #{tpu_custom_call.1} parent=1 // pred_fallthru
      _
    // Predicated region
    $region10: #{tpu_custom_call.1} parent=1 // pred_check
      _
    $region11: #{tpu_custom_call.1} parent=1 // pred_check_branch
      %34 = sbr.rel (0) target = $region13
    $region12: #{tpu_custom_call.1} parent=1 // pred_region
      _
    $region13: #{tpu_custom_call.1} parent=1 // pred_fallthru
      _
    // Predicated region
    $region14: #{tpu_custom_call.1} parent=1 // pred_check
      _
    $region15: #{tpu_custom_call.1} parent=1 // pred_check_branch
      %36 = sbr.rel (0) target = $region17
    $region16: #{tpu_custom_call.1} parent=1 // pred_region
      %37 = dma.done [#allocation3], 128
    $region17: #{tpu_custom_call.1} parent=1 // pred_fallthru
      _
    // Predicated region
    $region18: #{tpu_custom_call.1} parent=1 // pred_check
      _
    $region19: #{tpu_custom_call.1} parent=1 // pred_check_branch
      %39 = sbr.rel (0) target = $region21
    $region20: #{tpu_custom_call.1} parent=1 // pred_region
      %40 = dma.done [#allocation6], 2048
    $region21: #{tpu_custom_call.1} parent=1 // pred_fallthru
      _
    %v41 = vld [vmem:[#allocation2] sm:$0xff]
    %v42 = vld [vmem:[#allocation5] sm:$0xff]
    %v43 = vld [vmem:[#allocation5 + $0x8] sm:$0xff]
    %v44 = vld [vmem:[#allocation5 + $0x10] sm:$0xff]
    %v45 = vld [vmem:[#allocation5 + $0x18] sm:$0xff]
    %v46 = vld [vmem:[#allocation5 + $0x20] sm:$0xff]
    %v47 = vld [vmem:[#allocation5 + $0x28] sm:$0xff]
    %v48 = vld [vmem:[#allocation5 + $0x30] sm:$0xff]
    %v49 = vld [vmem:[#allocation5 + $0x38] sm:$0xff]
    %v50 = vld [vmem:[#allocation5 + $0x40] sm:$0xff]
    %v51 = vld [vmem:[#allocation5 + $0x48] sm:$0xff]
    %v52 = vld [vmem:[#allocation5 + $0x50] sm:$0xff]
    %v53 = vld [vmem:[#allocation5 + $0x58] sm:$0xff]
    %v54 = vld [vmem:[#allocation5 + $0x60] sm:$0xff]
    %v55 = vld [vmem:[#allocation5 + $0x68] sm:$0xff]
    %v56 = vld [vmem:[#allocation5 + $0x70] sm:$0xff]
    %v57 = vld [vmem:[#allocation5 + $0x78] sm:$0xff]
    %v58 = vld [vmem:[%s2] sm:$0x1]
    %v60 = vlaneseq
    %v61 = vshrl.u32 %v60, 7
    %v62 = vsub.s32 0, %v61
    %v63 = vrot.slane %v58, %v62
    %65 = vmatprep.subr.mxu0 0.0
    %66 = vmatpush1.msra.mxu0 %v42
    %67 = vmatprep.subr.mxu0 0.0
    %68 = vmatpush1.msra.mxu0 %v43
    %69 = vmatprep.subr.mxu0 0.0
    %70 = vmatpush1.msra.mxu0 %v44
    %71 = vmatprep.subr.mxu0 0.0
    %72 = vmatpush1.msra.mxu0 %v45
    %73 = vmatprep.subr.mxu0 0.0
    %74 = vmatpush1.msra.mxu0 %v46
    %75 = vmatprep.subr.mxu0 0.0
    %76 = vmatpush1.msra.mxu0 %v47
    %77 = vmatprep.subr.mxu0 0.0
    %78 = vmatpush1.msra.mxu0 %v48
    %79 = vmatprep.subr.mxu0 0.0
    %80 = vmatpush1.msra.mxu0 %v49
    %81 = vmatprep.subr.mxu0 0.0
    %82 = vmatpush1.msra.mxu0 %v50
    %83 = vmatprep.subr.mxu0 0.0
    %84 = vmatpush1.msra.mxu0 %v51
    %85 = vmatprep.subr.mxu0 0.0
    %86 = vmatpush1.msra.mxu0 %v52
    %87 = vmatprep.subr.mxu0 0.0
    %88 = vmatpush1.msra.mxu0 %v53
    %89 = vmatprep.subr.mxu0 0.0
    %90 = vmatpush1.msra.mxu0 %v54
    %91 = vmatprep.subr.mxu0 0.0
    %92 = vmatpush1.msra.mxu0 %v55
    %93 = vmatprep.subr.mxu0 0.0
    %94 = vmatpush1.msra.mxu0 %v56
    %95 = vmatprep.subr.mxu0 0.0
    %96 = vmatpush1.msra.mxu0 %v57
    %97 = vmatprep.subr.mxu0 0.0
    %98 = vmatpush1.msra.mxu0 0.0
    %99 = vmatprep.subr.mxu0 0.0
    %100 = vmatpush1.msra.mxu0 0.0
    %101 = vmatprep.subr.mxu0 0.0
    %102 = vmatpush1.msra.mxu0 0.0
    %103 = vmatprep.subr.mxu0 0.0
    %104 = vmatpush1.msra.mxu0 0.0
    %105 = vmatprep.subr.mxu0 0.0
    %106 = vmatpush1.msra.mxu0 0.0
    %107 = vmatprep.subr.mxu0 0.0
    %108 = vmatpush1.msra.mxu0 0.0
    %109 = vmatprep.subr.mxu0 0.0
    %110 = vmatpush1.msra.mxu0 0.0
    %111 = vmatprep.subr.mxu0 0.0
    %112 = vmatpush1.msra.mxu0 0.0
    %113 = vmatprep.subr.mxu0 0.0
    %114 = vmatpush1.msra.mxu0 0.0
    %115 = vmatprep.subr.mxu0 0.0
    %116 = vmatpush1.msra.mxu0 0.0
    %117 = vmatprep.subr.mxu0 0.0
    %118 = vmatpush1.msra.mxu0 0.0
    %119 = vmatprep.subr.mxu0 0.0
    %120 = vmatpush1.msra.mxu0 0.0
    %121 = vmatprep.subr.mxu0 0.0
    %122 = vmatpush1.msra.mxu0 0.0
    %123 = vmatprep.subr.mxu0 0.0
    %124 = vmatpush1.msra.mxu0 0.0
    %125 = vmatprep.subr.mxu0 0.0
    %126 = vmatpush1.msra.mxu0 0.0
    %127 = vmatprep.subr.mxu0 0.0
    %128 = vmatpush1.msra.mxu0 0.0
    %129 = vmatprep.mubr.f32.mxu0 0.0
    %130 = vmatmul.mubr.f32.gmra.mrb[0].mxu0 %v41
    %v131 = vpop.f32.mrb[0].mxu0
    %v132 = vadd.f32 %v63, %v131
    %v133 = vpop.f32.mrb[0].mxu0
    %134 = vdwg.mxu0
    %135 = vst [vmem:[#allocation7] sm:$0xff] %v132
    // Predicated region
    $region22: #{tpu_custom_call.1} parent=1 // pred_check
      _
    $region23: #{tpu_custom_call.1} parent=1 // pred_check_branch
      %137 = sbr.rel (0) target = $region25
    $region24: #{tpu_custom_call.1} parent=1 // pred_region
      %s139 = ssub.s32 128, 128
      %140 = vsyncadd [#allocation4], %s139
      %s142 = sshll.u32 [#allocation7], 4
      %s143 = int_to_ptr.vmem [resolvable:$true] %s142
      %145 = dma.vmem_to_hbm [thread:$0]  %s143, 128, %s3, [#allocation4]
    $region25: #{tpu_custom_call.1} parent=1 // pred_fallthru
      _
    // Predicated region
    $region26: #{tpu_custom_call.1} parent=1 // pred_check
      _
    $region27: #{tpu_custom_call.1} parent=1 // pred_check_branch
      %147 = sbr.rel (0) target = $region29
    $region28: #{tpu_custom_call.1} parent=1 // pred_region
      %148 = dma.done [#allocation4], 128
    $region29: #{tpu_custom_call.1} parent=1 // pred_fallthru
      _
    %149 = vsyncpa [#allocation3], 1
    %150 = vsyncpa [#allocation6], 1
    %151 = vsyncpa [#allocation4], 1

</llo_original>
